<compile_context>
chip_gen: v6e
topology: v6e:2x2x1
jax: 0.10.0
libtpu: 0.0.40
codegen_flags: <defaults>
</compile_context>

<pallas_src>
import functools
import math

import jax
import jax.numpy as jnp
from jax.experimental import pallas as pl
from jax.experimental.pallas import tpu as pltpu


def _round_up(x, m):
    return ((x + m - 1) // m) * m


def mlp_kernel(x_ref, w1_ref, b1_ref, w2_ref, b2_ref, w3_ref, b3_ref, o_ref):
    # One batch tile per grid step; weights/biases are VMEM-resident across steps.
    x = x_ref[...]                                            # bf16 activations
    h1 = jnp.dot(x, w1_ref[...], preferred_element_type=jnp.float32) + b1_ref[...]
    h1 = jnp.maximum(h1, 0.0)                                 # F.relu(self.fc1(state))
    h2 = jnp.dot(h1.astype(jnp.bfloat16), w2_ref[...],
                 preferred_element_type=jnp.float32) + b2_ref[...]
    h2 = jnp.maximum(h2, 0.0)                                 # F.relu(self.fc2(x))
    out = jnp.dot(h2.astype(jnp.bfloat16), w3_ref[...],
                  preferred_element_type=jnp.float32) + b3_ref[...]
    o_ref[...] = out.astype(o_ref.dtype)                      # self.fc3(x), no activation


@functools.partial(jax.jit, static_argnames=("max_batch_tile",))
def generic_network_forward(x, w1, b1, w2, b2, w3, b3, *, max_batch_tile=512):
    """Forward pass. Weights: (in_dim, out_dim); biases: (out_dim,)."""
    batch, in_dim = x.shape
    h1d, h2d, n_act = w1.shape[1], w2.shape[1], w3.shape[1]

    # Pad feature dims to full 128-lane tiles; pad batch to a multiple of the tile.
    in_p = _round_up(in_dim, 128)
    h1_p = _round_up(h1d, 128)
    h2_p = _round_up(h2d, 128)
    na_p = _round_up(n_act, 128)
    tb = min(max_batch_tile, _round_up(batch, 8))
    batch_p = _round_up(batch, tb)

    bf = jnp.bfloat16
    xp = jnp.zeros((batch_p, in_p), bf).at[:batch, :in_dim].set(x.astype(bf))
    w1p = jnp.zeros((in_p, h1_p), bf).at[:in_dim, :h1d].set(w1.astype(bf))
    w2p = jnp.zeros((h1_p, h2_p), bf).at[:h1d, :h2d].set(w2.astype(bf))
    w3p = jnp.zeros((h2_p, na_p), bf).at[:h2d, :n_act].set(w3.astype(bf))
    b1p = jnp.zeros((1, h1_p), jnp.float32).at[0, :h1d].set(b1.reshape(-1))
    b2p = jnp.zeros((1, h2_p), jnp.float32).at[0, :h2d].set(b2.reshape(-1))
    b3p = jnp.zeros((1, na_p), jnp.float32).at[0, :n_act].set(b3.reshape(-1))

    def resident(shape):
        return pl.BlockSpec(shape, lambda i: (0, 0))

    out_p = pl.pallas_call(
        mlp_kernel,
        out_shape=jax.ShapeDtypeStruct((batch_p, na_p), jnp.float32),
        grid=(batch_p // tb,),
        in_specs=[
            pl.BlockSpec((tb, in_p), lambda i: (i, 0)),     # activations: tiled over batch
            resident((in_p, h1_p)), resident((1, h1_p)),    # fc1 weight/bias: resident
            resident((h1_p, h2_p)), resident((1, h2_p)),    # fc2
            resident((h2_p, na_p)), resident((1, na_p)),    # fc3
        ],
        out_specs=pl.BlockSpec((tb, na_p), lambda i: (i, 0)),
        compiler_params=pltpu.CompilerParams(
            dimension_semantics=("parallel",),              # v7x: shard batch over 2 TCs
        ),
    )(xp, w1p, b1p, w2p, b2p, w3p, b3p)
    return out_p[:batch, :n_act]


def xavier_uniform(key, in_dim, out_dim):
    # torch.nn.init.xavier_uniform_(weight, gain=1); same bound for (in, out) layout.
    limit = math.sqrt(6.0 / (in_dim + out_dim))
    return jax.random.uniform(key, (in_dim, out_dim), jnp.float32, -limit, limit)


if __name__ == "__main__":
    # MountainCarContinuous-ish config: input_shape=[(2,)], fc1=32, fc2=32, n_actions=2.
    batch, input_dim, fc1_dims, fc2_dims, n_actions = 4, 2, 32, 32, 2

    key = jax.random.PRNGKey(0)
    k_obs, k1, k2, k3 = jax.random.split(key, 4)

    obs = jax.random.normal(k_obs, (batch, input_dim), jnp.float32)
    w1 = xavier_uniform(k1, input_dim, fc1_dims)
    b1 = jnp.zeros((fc1_dims,), jnp.float32)                # nn.init.constant_(bias, 0)
    w2 = xavier_uniform(k2, fc1_dims, fc2_dims)
    b2 = jnp.zeros((fc2_dims,), jnp.float32)
    w3 = xavier_uniform(k3, fc2_dims, n_actions)
    b3 = jnp.zeros((n_actions,), jnp.float32)

    out = generic_network_forward(obs, w1, b1, w2, b2, w3, b3)
    out = jax.block_until_ready(out)
    assert out.shape == (batch, n_actions)

    # Reference mirroring the kernel's bf16-MXU / f32-accumulate arithmetic (tight check).
    bf = jnp.bfloat16
    ref = jnp.maximum(jnp.dot(obs.astype(bf), w1.astype(bf),
                              preferred_element_type=jnp.float32) + b1, 0.0)
    ref = jnp.maximum(jnp.dot(ref.astype(bf), w2.astype(bf),
                              preferred_element_type=jnp.float32) + b2, 0.0)
    ref = jnp.dot(ref.astype(bf), w3.astype(bf), preferred_element_type=jnp.float32) + b3
    assert jnp.allclose(out, ref, atol=1e-5, rtol=1e-5)

    # Full-f32 semantic reference (loose tolerance covers the bf16 matmul inputs).
    ref32 = jnp.maximum(obs @ w1 + b1, 0.0)
    ref32 = jnp.maximum(ref32 @ w2 + b2, 0.0)
    ref32 = ref32 @ w3 + b3
    assert jnp.allclose(out, ref32, atol=5e-2, rtol=5e-2)

    # TODO(synk): sample() (Normal sampling / tanh squashing / log_prob) and the Adam
    # optimizer + LambdaLR scheduler are training/runtime utilities, not part of forward().
    print("KERNEL_OK")
</pallas_src>

<mosaic_0001>
module attributes {stable_mosaic.version = 11 : i64} {
  func.func @mlp_kernel(%arg0: i32, %arg1: memref<8x128xbf16, #tpu.memory_space<vmem>>, %arg2: memref<128x128xbf16, #tpu.memory_space<vmem>>, %arg3: memref<1x128xf32, #tpu.memory_space<vmem>>, %arg4: memref<128x128xbf16, #tpu.memory_space<vmem>>, %arg5: memref<1x128xf32, #tpu.memory_space<vmem>>, %arg6: memref<128x128xbf16, #tpu.memory_space<vmem>>, %arg7: memref<1x128xf32, #tpu.memory_space<vmem>>, %arg8: memref<8x128xf32, #tpu.memory_space<vmem>>) attributes {dimension_semantics = [#tpu.dimension_semantics<parallel>], iteration_bounds = array<i64: 1>, scalar_prefetch = 0 : i64, scratch_operands = 0 : i64, tpu.core_type = #tpu.core_type<tc>, window_params = [{transform_indices = @transform_0, window_bounds = array<i64: 8, 128>}, {pipeline_mode = #tpu.pipeline_mode<synchronous>, transform_indices = @transform_1, window_bounds = array<i64: 128, 128>}, {pipeline_mode = #tpu.pipeline_mode<synchronous>, transform_indices = @transform_2, window_bounds = array<i64: 1, 128>}, {pipeline_mode = #tpu.pipeline_mode<synchronous>, transform_indices = @transform_3, window_bounds = array<i64: 128, 128>}, {pipeline_mode = #tpu.pipeline_mode<synchronous>, transform_indices = @transform_4, window_bounds = array<i64: 1, 128>}, {pipeline_mode = #tpu.pipeline_mode<synchronous>, transform_indices = @transform_5, window_bounds = array<i64: 128, 128>}, {pipeline_mode = #tpu.pipeline_mode<synchronous>, transform_indices = @transform_6, window_bounds = array<i64: 1, 128>}, {transform_indices = @transform_7, window_bounds = array<i64: 8, 128>}]} {
    %c0 = arith.constant 0 : index
    %c0_0 = arith.constant 0 : index
    %0 = vector.load %arg1[%c0, %c0_0] : memref<8x128xbf16, #tpu.memory_space<vmem>>, vector<8x128xbf16>
    %c0_1 = arith.constant 0 : index
    %c0_2 = arith.constant 0 : index
    %1 = vector.load %arg2[%c0_1, %c0_2] : memref<128x128xbf16, #tpu.memory_space<vmem>>, vector<128x128xbf16>
    %cst = arith.constant dense<0.000000e+00> : vector<8x128xf32>
    %2 = tpu.matmul %0, %1, %cst {dimension_numbers = #tpu.dot_dimension_numbers<[1], [0], [0], [1], [0, 0, 1, 1], [], []>} : vector<8x128xbf16>, vector<128x128xbf16>, vector<8x128xf32> -> vector<8x128xf32>
    %c0_3 = arith.constant 0 : index
    %c0_4 = arith.constant 0 : index
    %3 = vector.load %arg3[%c0_3, %c0_4] : memref<1x128xf32, #tpu.memory_space<vmem>>, vector<1x128xf32>
    %4 = vector.broadcast %3 : vector<1x128xf32> to vector<8x128xf32>
    %5 = arith.addf %2, %4 : vector<8x128xf32>
    %cst_5 = arith.constant 0.000000e+00 : f32
    %6 = vector.broadcast %cst_5 : f32 to vector<8x128xf32>
    %7 = arith.maximumf %5, %6 : vector<8x128xf32>
    %8 = arith.truncf %7 : vector<8x128xf32> to vector<8x128xbf16>
    %c0_6 = arith.constant 0 : index
    %c0_7 = arith.constant 0 : index
    %9 = vector.load %arg4[%c0_6, %c0_7] : memref<128x128xbf16, #tpu.memory_space<vmem>>, vector<128x128xbf16>
    %cst_8 = arith.constant dense<0.000000e+00> : vector<8x128xf32>
    %10 = tpu.matmul %8, %9, %cst_8 {dimension_numbers = #tpu.dot_dimension_numbers<[1], [0], [0], [1], [0, 0, 1, 1], [], []>} : vector<8x128xbf16>, vector<128x128xbf16>, vector<8x128xf32> -> vector<8x128xf32>
    %c0_9 = arith.constant 0 : index
    %c0_10 = arith.constant 0 : index
    %11 = vector.load %arg5[%c0_9, %c0_10] : memref<1x128xf32, #tpu.memory_space<vmem>>, vector<1x128xf32>
    %12 = vector.broadcast %11 : vector<1x128xf32> to vector<8x128xf32>
    %13 = arith.addf %10, %12 : vector<8x128xf32>
    %cst_11 = arith.constant 0.000000e+00 : f32
    %14 = vector.broadcast %cst_11 : f32 to vector<8x128xf32>
    %15 = arith.maximumf %13, %14 : vector<8x128xf32>
    %16 = arith.truncf %15 : vector<8x128xf32> to vector<8x128xbf16>
    %c0_12 = arith.constant 0 : index
    %c0_13 = arith.constant 0 : index
    %17 = vector.load %arg6[%c0_12, %c0_13] : memref<128x128xbf16, #tpu.memory_space<vmem>>, vector<128x128xbf16>
    %cst_14 = arith.constant dense<0.000000e+00> : vector<8x128xf32>
    %18 = tpu.matmul %16, %17, %cst_14 {dimension_numbers = #tpu.dot_dimension_numbers<[1], [0], [0], [1], [0, 0, 1, 1], [], []>} : vector<8x128xbf16>, vector<128x128xbf16>, vector<8x128xf32> -> vector<8x128xf32>
    %c0_15 = arith.constant 0 : index
    %c0_16 = arith.constant 0 : index
    %19 = vector.load %arg7[%c0_15, %c0_16] : memref<1x128xf32, #tpu.memory_space<vmem>>, vector<1x128xf32>
    %20 = vector.broadcast %19 : vector<1x128xf32> to vector<8x128xf32>
    %21 = arith.addf %18, %20 : vector<8x128xf32>
    %c0_17 = arith.constant 0 : index
    %c0_18 = arith.constant 0 : index
    %22 = vector.load %arg8[%c0_17, %c0_18] : memref<8x128xf32, #tpu.memory_space<vmem>>, vector<8x128xf32>
    tpu.vector_store %arg8[%c0_17, %c0_18], %21 {strides = array<i32>} : memref<8x128xf32, #tpu.memory_space<vmem>>, vector<8x128xf32>,
    return
  }
  func.func @transform_0(%arg0: i32) -> (i32, i32) {
    %c0_i32 = arith.constant 0 : i32
    %c0_i32_0 = arith.constant 0 : i32
    return %arg0, %c0_i32 : i32, i32
  }
  func.func @transform_1(%arg0: i32) -> (i32, i32) {
    %c0_i32 = arith.constant 0 : i32
    %c0_i32_0 = arith.constant 0 : i32
    %c0_i32_1 = arith.constant 0 : i32
    return %c0_i32, %c0_i32_0 : i32, i32
  }
  func.func @transform_2(%arg0: i32) -> (i32, i32) {
    %c0_i32 = arith.constant 0 : i32
    %c0_i32_0 = arith.constant 0 : i32
    %c0_i32_1 = arith.constant 0 : i32
    return %c0_i32, %c0_i32_0 : i32, i32
  }
  func.func @transform_3(%arg0: i32) -> (i32, i32) {
    %c0_i32 = arith.constant 0 : i32
    %c0_i32_0 = arith.constant 0 : i32
    %c0_i32_1 = arith.constant 0 : i32
    return %c0_i32, %c0_i32_0 : i32, i32
  }
  func.func @transform_4(%arg0: i32) -> (i32, i32) {
    %c0_i32 = arith.constant 0 : i32
    %c0_i32_0 = arith.constant 0 : i32
    %c0_i32_1 = arith.constant 0 : i32
    return %c0_i32, %c0_i32_0 : i32, i32
  }
  func.func @transform_5(%arg0: i32) -> (i32, i32) {
    %c0_i32 = arith.constant 0 : i32
    %c0_i32_0 = arith.constant 0 : i32
    %c0_i32_1 = arith.constant 0 : i32
    return %c0_i32, %c0_i32_0 : i32, i32
  }
  func.func @transform_6(%arg0: i32) -> (i32, i32) {
    %c0_i32 = arith.constant 0 : i32
    %c0_i32_0 = arith.constant 0 : i32
    %c0_i32_1 = arith.constant 0 : i32
    return %c0_i32, %c0_i32_0 : i32, i32
  }
  func.func @transform_7(%arg0: i32) -> (i32, i32) {
    %c0_i32 = arith.constant 0 : i32
    %c0_i32_0 = arith.constant 0 : i32
    return %arg0, %c0_i32 : i32, i32
  }
}

</mosaic_0001>

<llo_original>
// kernel: generic_network_forward.1
$region0: #{generic_network_forward.1}
  #allocation0 [shape = 'u32[]', space=smem, size = 0x4, offset = 0x4, fixed_abs, tag = 'smem constant byte address 0x4 - core index']
  #allocation1 [shape = 'u32[144,128]{1,0:T(1,128)}', space=vmem, size = 0x12000, scoped, tag = 'internal scratch']
  %s0 = inlined_call_operand.vmem [shape: bf16[8,128], index: 0, kind: input, shape index: {}]
  %s1 = inlined_call_operand.vmem [shape: bf16[128,128], index: 1, kind: input, shape index: {}]
  %s2 = inlined_call_operand.vmem [shape: f32[1,128], index: 2, kind: input, shape index: {}]
  %s3 = inlined_call_operand.vmem [shape: bf16[128,128], index: 3, kind: input, shape index: {}]
  %s4 = inlined_call_operand.vmem [shape: f32[1,128], index: 4, kind: input, shape index: {}]
  %s5 = inlined_call_operand.vmem [shape: bf16[128,128], index: 5, kind: input, shape index: {}]
  %s6 = inlined_call_operand.vmem [shape: f32[1,128], index: 6, kind: input, shape index: {}]
  %s7 = inlined_call_operand.vmem [shape: f32[8,128], index: 7, kind: output, shape index: {}]
  %s8 = sld [smem:[#allocation0]]
  $region38: #{generic_network_forward.1} parent=0
    _
  %s10 = ssub.s32 1, %s8
  %s11 = scalar_select 0, %s10, %s8
  // Predicated region
  $region2: #{generic_network_forward.1} parent=0 // pred_check
    _
  $region3: #{generic_network_forward.1} parent=0 // pred_check_branch
    %13 = sbr.rel (0) target = $region5
  $region4: #{generic_network_forward.1} parent=0 // pred_region
    _
  $region5: #{generic_network_forward.1} parent=0 // pred_fallthru
    _
  // Predicated region
  $region6: #{generic_network_forward.1} parent=0 // pred_check
    _
  $region7: #{generic_network_forward.1} parent=0 // pred_check_branch
    %15 = sbr.rel (0) target = $region9
  $region8: #{generic_network_forward.1} parent=0 // pred_region
    _
  $region9: #{generic_network_forward.1} parent=0 // pred_fallthru
    _
  // Predicated region
  $region10: #{generic_network_forward.1} parent=0 // pred_check
    _
  $region11: #{generic_network_forward.1} parent=0 // pred_check_branch
    %17 = sbr.rel (0) target = $region13
  $region12: #{generic_network_forward.1} parent=0 // pred_region
    _
  $region13: #{generic_network_forward.1} parent=0 // pred_fallthru
    _
  // Predicated region
  $region14: #{generic_network_forward.1} parent=0 // pred_check
    _
  $region15: #{generic_network_forward.1} parent=0 // pred_check_branch
    %19 = sbr.rel (0) target = $region17
  $region16: #{generic_network_forward.1} parent=0 // pred_region
    _
  $region17: #{generic_network_forward.1} parent=0 // pred_fallthru
    _
  // Predicated region
  $region18: #{generic_network_forward.1} parent=0 // pred_check
    _
  $region19: #{generic_network_forward.1} parent=0 // pred_check_branch
    %21 = sbr.rel (0) target = $region21
  $region20: #{generic_network_forward.1} parent=0 // pred_region
    _
  $region21: #{generic_network_forward.1} parent=0 // pred_fallthru
    _
  // Predicated region
  $region22: #{generic_network_forward.1} parent=0 // pred_check
    _
  $region23: #{generic_network_forward.1} parent=0 // pred_check_branch
    %23 = sbr.rel (0) target = $region25
  $region24: #{generic_network_forward.1} parent=0 // pred_region
    _
  $region25: #{generic_network_forward.1} parent=0 // pred_fallthru
    _
  // Predicated region
  $region26: #{generic_network_forward.1} parent=0 // pred_check
    _
  $region27: #{generic_network_forward.1} parent=0 // pred_check_branch
    %25 = sbr.rel (0) target = $region29
  $region28: #{generic_network_forward.1} parent=0 // pred_region
    _
  $region29: #{generic_network_forward.1} parent=0 // pred_fallthru
    _
  %v27 = vld [vmem:[%s0] sm:$0xf]
  %v28 = vld [vmem:[%s1] sm:$0xf]
  %v29 = vld [vmem:[%s1 + $0x4] sm:$0xf]
  %v30 = vld [vmem:[%s1 + $0x8] sm:$0xf]
  %v31 = vld [vmem:[%s1 + $0xc] sm:$0xf]
  %v32 = vld [vmem:[%s1 + $0x10] sm:$0xf]
  %v33 = vld [vmem:[%s1 + $0x14] sm:$0xf]
  %v34 = vld [vmem:[%s1 + $0x18] sm:$0xf]
  %v35 = vld [vmem:[%s1 + $0x1c] sm:$0xf]
  %v36 = vld [vmem:[%s1 + $0x20] sm:$0xf]
  %v37 = vld [vmem:[%s1 + $0x24] sm:$0xf]
  %v38 = vld [vmem:[%s1 + $0x28] sm:$0xf]
  %v39 = vld [vmem:[%s1 + $0x2c] sm:$0xf]
  %v40 = vld [vmem:[%s1 + $0x30] sm:$0xf]
  %v41 = vld [vmem:[%s1 + $0x34] sm:$0xf]
  %v42 = vld [vmem:[%s1 + $0x38] sm:$0xf]
  %v43 = vld [vmem:[%s1 + $0x3c] sm:$0xf]
  %v44 = vld [vmem:[%s2] sm:$0x1]
  %v46 = vlaneseq
  %v47 = vshrl.u32 %v46, 7
  %v48 = vsub.s32 0, %v47
  %v49 = vrot.slane %v44, %v48
  %v67 = vunpack.c.l.b16 %v28
  %v68 = vunpack.c.l.b16 %v29
  %v69 = vunpack.c.l.b16 %v30
  %v70 = vunpack.c.l.b16 %v31
  %v71 = vunpack.c.l.b16 %v32
  %v72 = vunpack.c.l.b16 %v33
  %v73 = vunpack.c.l.b16 %v34
  %v74 = vunpack.c.l.b16 %v35
  %v75 = vunpack.c.l.b16 %v36
  %v76 = vunpack.c.l.b16 %v37
  %v77 = vunpack.c.l.b16 %v38
  %v78 = vunpack.c.l.b16 %v39
  %v79 = vunpack.c.l.b16 %v40
  %v80 = vunpack.c.l.b16 %v41
  %v81 = vunpack.c.l.b16 %v42
  %v82 = vunpack.c.l.b16 %v43
  %v83 = vpack.c.b16 %v68, %v67
  %v84 = vpack.c.b16 %v70, %v69
  %v85 = vpack.c.b16 %v72, %v71
  %v86 = vpack.c.b16 %v74, %v73
  %v87 = vpack.c.b16 %v76, %v75
  %v88 = vpack.c.b16 %v78, %v77
  %v89 = vpack.c.b16 %v80, %v79
  %v90 = vpack.c.b16 %v82, %v81
  %99 = vmatprep.subr.bf16.mxu0 0
  %100 = vmatpush1.bf16.msra.mxu0 %v90
  %101 = vmatprep.subr.bf16.mxu0 0
  %102 = vmatpush1.bf16.msra.mxu0 %v89
  %103 = vmatprep.subr.bf16.mxu0 0
  %104 = vmatpush1.bf16.msra.mxu0 %v88
  %105 = vmatprep.subr.bf16.mxu0 0
  %106 = vmatpush1.bf16.msra.mxu0 %v87
  %107 = vmatprep.subr.bf16.mxu0 0
  %108 = vmatpush1.bf16.msra.mxu0 %v86
  %109 = vmatprep.subr.bf16.mxu0 0
  %110 = vmatpush1.bf16.msra.mxu0 %v85
  %111 = vmatprep.subr.bf16.mxu0 0
  %112 = vmatpush1.bf16.msra.mxu0 %v84
  %113 = vmatprep.subr.bf16.mxu0 0
  %114 = vmatpush1.bf16.msra.mxu0 %v83
  %115 = vmatprep.subr.bf16.mxu0 0
  %116 = vmatpush2.bf16.msra.mxu0 0
  %117 = vmatprep.subr.bf16.mxu0 0
  %118 = vmatpush2.bf16.msra.mxu0 0
  %119 = vmatprep.subr.bf16.mxu0 0
  %120 = vmatpush2.bf16.msra.mxu0 0
  %121 = vmatprep.subr.bf16.mxu0 0
  %122 = vmatpush2.bf16.msra.mxu0 0
  %123 = vmatprep.subr.bf16.mxu0 0
  %124 = vmatpush2.bf16.msra.mxu0 0
  %125 = vmatprep.subr.bf16.mxu0 0
  %126 = vmatpush2.bf16.msra.mxu0 0
  %127 = vmatprep.subr.bf16.mxu0 0
  %128 = vmatpush2.bf16.msra.mxu0 0
  %129 = vmatprep.subr.bf16.mxu0 0
  %130 = vmatpush2.bf16.msra.mxu0 0
  %131 = vmatprep.mubr.bf16.mxu0 0
  %132 = vmatmul.mubr.bf16.gmra.mxu0 %v27
  %v133 = vpop.f32.mrf.mxu0
  %v134 = vadd.f32 %v49, %v133
  %v135 = vpop.f32.mrf.mxu0
  %v136 = vpop.f32.mrf.mxu0
  %v137 = vpop.f32.mrf.mxu0
  %138 = vdwg.mxu0
  %v139 = vmax.f32 %v134, 0.0
  %v140 = vpack.c.bf16 %v139, %v139
  %v141 = vld [vmem:[%s3] sm:$0xf]
  %v142 = vld [vmem:[%s3 + $0x4] sm:$0xf]
  %v143 = vld [vmem:[%s3 + $0x8] sm:$0xf]
  %v144 = vld [vmem:[%s3 + $0xc] sm:$0xf]
  %v145 = vld [vmem:[%s3 + $0x10] sm:$0xf]
  %v146 = vld [vmem:[%s3 + $0x14] sm:$0xf]
  %v147 = vld [vmem:[%s3 + $0x18] sm:$0xf]
  %v148 = vld [vmem:[%s3 + $0x1c] sm:$0xf]
  %v149 = vld [vmem:[%s3 + $0x20] sm:$0xf]
  %v150 = vld [vmem:[%s3 + $0x24] sm:$0xf]
  %v151 = vld [vmem:[%s3 + $0x28] sm:$0xf]
  %v152 = vld [vmem:[%s3 + $0x2c] sm:$0xf]
  %v153 = vld [vmem:[%s3 + $0x30] sm:$0xf]
  %v154 = vld [vmem:[%s3 + $0x34] sm:$0xf]
  %v155 = vld [vmem:[%s3 + $0x38] sm:$0xf]
  %v156 = vld [vmem:[%s3 + $0x3c] sm:$0xf]
  %v157 = vld [vmem:[%s4] sm:$0x1]
  %v159 = vlaneseq
  %v160 = vshrl.u32 %v159, 7
  %v161 = vsub.s32 0, %v160
  %v162 = vrot.slane %v157, %v161
  %v180 = vunpack.c.l.b16 %v141
  %v181 = vunpack.c.l.b16 %v142
  %v182 = vunpack.c.l.b16 %v143
  %v183 = vunpack.c.l.b16 %v144
  %v184 = vunpack.c.l.b16 %v145
  %v185 = vunpack.c.l.b16 %v146
  %v186 = vunpack.c.l.b16 %v147
  %v187 = vunpack.c.l.b16 %v148
  %v188 = vunpack.c.l.b16 %v149
  %v189 = vunpack.c.l.b16 %v150
  %v190 = vunpack.c.l.b16 %v151
  %v191 = vunpack.c.l.b16 %v152
  %v192 = vunpack.c.l.b16 %v153
  %v193 = vunpack.c.l.b16 %v154
  %v194 = vunpack.c.l.b16 %v155
  %v195 = vunpack.c.l.b16 %v156
  %v196 = vpack.c.b16 %v181, %v180
  %v197 = vpack.c.b16 %v183, %v182
  %v198 = vpack.c.b16 %v185, %v184
  %v199 = vpack.c.b16 %v187, %v186
  %v200 = vpack.c.b16 %v189, %v188
  %v201 = vpack.c.b16 %v191, %v190
  %v202 = vpack.c.b16 %v193, %v192
  %v203 = vpack.c.b16 %v195, %v194
  %212 = vmatprep.subr.bf16.mxu0 0
  %213 = vmatpush1.bf16.msra.mxu0 %v203
  %214 = vmatprep.subr.bf16.mxu0 0
  %215 = vmatpush1.bf16.msra.mxu0 %v202
  %216 = vmatprep.subr.bf16.mxu0 0
  %217 = vmatpush1.bf16.msra.mxu0 %v201
  %218 = vmatprep.subr.bf16.mxu0 0
  %219 = vmatpush1.bf16.msra.mxu0 %v200
  %220 = vmatprep.subr.bf16.mxu0 0
  %221 = vmatpush1.bf16.msra.mxu0 %v199
  %222 = vmatprep.subr.bf16.mxu0 0
  %223 = vmatpush1.bf16.msra.mxu0 %v198
  %224 = vmatprep.subr.bf16.mxu0 0
  %225 = vmatpush1.bf16.msra.mxu0 %v197
  %226 = vmatprep.subr.bf16.mxu0 0
  %227 = vmatpush1.bf16.msra.mxu0 %v196
  %228 = vmatprep.subr.bf16.mxu0 0
  %229 = vmatpush2.bf16.msra.mxu0 0
  %230 = vmatprep.subr.bf16.mxu0 0
  %231 = vmatpush2.bf16.msra.mxu0 0
  %232 = vmatprep.subr.bf16.mxu0 0
  %233 = vmatpush2.bf16.msra.mxu0 0
  %234 = vmatprep.subr.bf16.mxu0 0
  %235 = vmatpush2.bf16.msra.mxu0 0
  %236 = vmatprep.subr.bf16.mxu0 0
  %237 = vmatpush2.bf16.msra.mxu0 0
  %238 = vmatprep.subr.bf16.mxu0 0
  %239 = vmatpush2.bf16.msra.mxu0 0
  %240 = vmatprep.subr.bf16.mxu0 0
  %241 = vmatpush2.bf16.msra.mxu0 0
  %242 = vmatprep.subr.bf16.mxu0 0
  %243 = vmatpush2.bf16.msra.mxu0 0
  %244 = vmatprep.mubr.bf16.mxu0 0
  %245 = vmatmul.mubr.bf16.gmra.mxu0 %v140
  %v246 = vpop.f32.mrf.mxu0
  %v247 = vadd.f32 %v162, %v246
  %v248 = vpop.f32.mrf.mxu0
  %v249 = vpop.f32.mrf.mxu0
  %v250 = vpop.f32.mrf.mxu0
  %251 = vdwg.mxu0
  %v252 = vmax.f32 %v247, 0.0
  %v253 = vpack.c.bf16 %v252, %v252
  %v254 = vld [vmem:[%s5] sm:$0xf]
  %v255 = vld [vmem:[%s5 + $0x4] sm:$0xf]
  %v256 = vld [vmem:[%s5 + $0x8] sm:$0xf]
  %v257 = vld [vmem:[%s5 + $0xc] sm:$0xf]
  %v258 = vld [vmem:[%s5 + $0x10] sm:$0xf]
  %v259 = vld [vmem:[%s5 + $0x14] sm:$0xf]
  %v260 = vld [vmem:[%s5 + $0x18] sm:$0xf]
  %v261 = vld [vmem:[%s5 + $0x1c] sm:$0xf]
  %v262 = vld [vmem:[%s5 + $0x20] sm:$0xf]
  %v263 = vld [vmem:[%s5 + $0x24] sm:$0xf]
  %v264 = vld [vmem:[%s5 + $0x28] sm:$0xf]
  %v265 = vld [vmem:[%s5 + $0x2c] sm:$0xf]
  %v266 = vld [vmem:[%s5 + $0x30] sm:$0xf]
  %v267 = vld [vmem:[%s5 + $0x34] sm:$0xf]
  %v268 = vld [vmem:[%s5 + $0x38] sm:$0xf]
  %v269 = vld [vmem:[%s5 + $0x3c] sm:$0xf]
  %v270 = vld [vmem:[%s6] sm:$0x1]
  %v272 = vlaneseq
  %v273 = vshrl.u32 %v272, 7
  %v274 = vsub.s32 0, %v273
  %v275 = vrot.slane %v270, %v274
  %v293 = vunpack.c.l.b16 %v254
  %v294 = vunpack.c.l.b16 %v255
  %v295 = vunpack.c.l.b16 %v256
  %v296 = vunpack.c.l.b16 %v257
  %v297 = vunpack.c.l.b16 %v258
  %v298 = vunpack.c.l.b16 %v259
  %v299 = vunpack.c.l.b16 %v260
  %v300 = vunpack.c.l.b16 %v261
  %v301 = vunpack.c.l.b16 %v262
  %v302 = vunpack.c.l.b16 %v263
  %v303 = vunpack.c.l.b16 %v264
  %v304 = vunpack.c.l.b16 %v265
  %v305 = vunpack.c.l.b16 %v266
  %v306 = vunpack.c.l.b16 %v267
  %v307 = vunpack.c.l.b16 %v268
  %v308 = vunpack.c.l.b16 %v269
  %v309 = vpack.c.b16 %v294, %v293
  %v310 = vpack.c.b16 %v296, %v295
  %v311 = vpack.c.b16 %v298, %v297
  %v312 = vpack.c.b16 %v300, %v299
  %v313 = vpack.c.b16 %v302, %v301
  %v314 = vpack.c.b16 %v304, %v303
  %v315 = vpack.c.b16 %v306, %v305
  %v316 = vpack.c.b16 %v308, %v307
  %325 = vmatprep.subr.bf16.mxu0 0
  %326 = vmatpush1.bf16.msra.mxu0 %v316
  %327 = vmatprep.subr.bf16.mxu0 0
  %328 = vmatpush1.bf16.msra.mxu0 %v315
  %329 = vmatprep.subr.bf16.mxu0 0
  %330 = vmatpush1.bf16.msra.mxu0 %v314
  %331 = vmatprep.subr.bf16.mxu0 0
  %332 = vmatpush1.bf16.msra.mxu0 %v313
  %333 = vmatprep.subr.bf16.mxu0 0
  %334 = vmatpush1.bf16.msra.mxu0 %v312
  %335 = vmatprep.subr.bf16.mxu0 0
  %336 = vmatpush1.bf16.msra.mxu0 %v311
  %337 = vmatprep.subr.bf16.mxu0 0
  %338 = vmatpush1.bf16.msra.mxu0 %v310
  %339 = vmatprep.subr.bf16.mxu0 0
  %340 = vmatpush1.bf16.msra.mxu0 %v309
  %341 = vmatprep.subr.bf16.mxu0 0
  %342 = vmatpush2.bf16.msra.mxu0 0
  %343 = vmatprep.subr.bf16.mxu0 0
  %344 = vmatpush2.bf16.msra.mxu0 0
  %345 = vmatprep.subr.bf16.mxu0 0
  %346 = vmatpush2.bf16.msra.mxu0 0
  %347 = vmatprep.subr.bf16.mxu0 0
  %348 = vmatpush2.bf16.msra.mxu0 0
  %349 = vmatprep.subr.bf16.mxu0 0
  %350 = vmatpush2.bf16.msra.mxu0 0
  %351 = vmatprep.subr.bf16.mxu0 0
  %352 = vmatpush2.bf16.msra.mxu0 0
  %353 = vmatprep.subr.bf16.mxu0 0
  %354 = vmatpush2.bf16.msra.mxu0 0
  %355 = vmatprep.subr.bf16.mxu0 0
  %356 = vmatpush2.bf16.msra.mxu0 0
  %357 = vmatprep.mubr.bf16.mxu0 0
  %358 = vmatmul.mubr.bf16.gmra.mxu0 %v253
  %v359 = vpop.f32.mrf.mxu0
  %v360 = vadd.f32 %v275, %v359
  %v361 = vpop.f32.mrf.mxu0
  %v362 = vpop.f32.mrf.mxu0
  %v363 = vpop.f32.mrf.mxu0
  %364 = vdwg.mxu0
  %365 = vst [vmem:[%s7] sm:$0xff] %v360
  // Predicated region
  $region30: #{generic_network_forward.1} parent=0 // pred_check
    _
  $region31: #{generic_network_forward.1} parent=0 // pred_check_branch
    %367 = sbr.rel (0) target = $region33
  $region32: #{generic_network_forward.1} parent=0 // pred_region
    _
  $region33: #{generic_network_forward.1} parent=0 // pred_fallthru
    _
  // Predicated region
  $region34: #{generic_network_forward.1} parent=0 // pred_check
    _
  $region35: #{generic_network_forward.1} parent=0 // pred_check_branch
    %369 = sbr.rel (0) target = $region37
  $region36: #{generic_network_forward.1} parent=0 // pred_region
    _
  $region37: #{generic_network_forward.1} parent=0 // pred_fallthru
    _

</llo_original>
